<compile_context>
chip_gen: v5e
topology: v5e:2x2
jax: 0.10.0
libtpu: 0.0.40
codegen_flags: <defaults>
</compile_context>

<pallas_src>
import functools

import jax
import jax.numpy as jnp
from jax.experimental import pallas as pl
from jax.experimental.pallas import tpu as pltpu


def _make_dep_gcn_kernel(n_active: int, d: int):
    """Build the kernel closure for `n_active` real labels and feature dim d."""

    def kernel(x_ref, w_cat_ref, a_ref, r_ref, b_ref, o_ref):
        # x_ref     : (N, D)          token embeddings
        # w_cat_ref : (D, Lp*D)       per-label weights, concatenated on lanes
        # a_ref     : (Lp, N, N)      per-label adjacency (zero-padded labels)
        # r_ref     : (N, Lp)         per-label incoming-edge counts (A_l @ 1)
        # b_ref     : (Lp, D)         per-label biases
        # o_ref     : (N, D)          relu( sum_l A_l (X W_l + 1 b_l^T) )
        x = x_ref[...]

        # Hoisted bias contribution:  sum_l A_l (1 b_l^T) == R @ B
        acc = jnp.dot(r_ref[...], b_ref[...], preferred_element_type=jnp.float32)

        # All per-label messages in one lane-dense MXU call:
        #   m_all[:, l*D:(l+1)*D] = X @ W_l
        m_all = jnp.dot(x, w_cat_ref[...], preferred_element_type=jnp.float32)

        # Aggregate through the per-label adjacency.  Statically unrolled;
        # only the real (non-root, non-padding) labels are touched.
        for l in range(n_active):
            acc = acc + jnp.dot(
                a_ref[l],
                m_all[:, l * d:(l + 1) * d],
                preferred_element_type=jnp.float32,
            )

        o_ref[...] = jnp.maximum(acc, 0.0).astype(o_ref.dtype)

    return kernel


@functools.partial(jax.jit, static_argnames=("active_labels",))
def dep_gcn_forward(x, weights, biases, adjacency, active_labels=None):
    """x: (N, D) f32; weights: (L, D_in, D_out); biases: (L, D); adjacency: (L, N, N).

    `weights` is stored as (in, out), i.e. already transposed relative to
    PyTorch nn.Linear's (out, in) convention, so the kernel computes X @ W.
    `active_labels` is a static tuple of label indices actually used by
    message_passing (everything except 'root').
    """
    L_total, D, _ = weights.shape
    N = x.shape[0]
    if active_labels is None:
        active_labels = tuple(range(L_total))
    n_active = len(active_labels)

    idx = jnp.asarray(active_labels, dtype=jnp.int32)
    w = weights[idx]    # (La, D, D)
    b = biases[idx]     # (La, D)
    a = adjacency[idx]  # (La, N, N)

    # Pad the label axis to a multiple of 8 (sublane alignment); padded labels
    # are all-zero and contribute nothing.
    l_pad = -(-n_active // 8) * 8
    pad = l_pad - n_active
    if pad:
        w = jnp.pad(w, ((0, pad), (0, 0), (0, 0)))
        b = jnp.pad(b, ((0, pad), (0, 0)))
        a = jnp.pad(a, ((0, pad), (0, 0), (0, 0)))

    # W_cat (D, Lp*D): column block l holds W_l.
    w_cat = jnp.transpose(w, (1, 0, 2)).reshape(D, l_pad * D)
    # R (N, Lp): number of label-l edges flowing into each token (A_l @ 1).
    r = jnp.transpose(a.sum(axis=2), (1, 0))

    kernel = _make_dep_gcn_kernel(n_active, D)
    return pl.pallas_call(
        kernel,
        out_shape=jax.ShapeDtypeStruct((N, D), jnp.float32),
        grid=(1,),  # single invocation: everything resident in VMEM
        in_specs=[
            pl.BlockSpec((N, D), lambda i: (0, 0)),             # X
            pl.BlockSpec((D, l_pad * D), lambda i: (0, 0)),     # W_cat
            pl.BlockSpec((l_pad, N, N), lambda i: (0, 0, 0)),   # A
            pl.BlockSpec((N, l_pad), lambda i: (0, 0)),         # R
            pl.BlockSpec((l_pad, D), lambda i: (0, 0)),         # B
        ],
        out_specs=pl.BlockSpec((N, D), lambda i: (0, 0)),
        compiler_params=pltpu.CompilerParams(
            dimension_semantics=("arbitrary",),
        ),
    )(x, w_cat, a, r, b)


def build_adjacency(n_tokens, triples, label_to_idx, reverse_case=True):
    """Plain-JAX glue: turn dependency triples into per-label adjacency mats."""
    L = len(label_to_idx)
    A = jnp.zeros((L, n_tokens, n_tokens), dtype=jnp.float32)
    # 'self' label -> identity (W_self is applied to every token's own embedding).
    A = A.at[label_to_idx["self"]].set(jnp.eye(n_tokens, dtype=jnp.float32))
    # 'root' Linear exists in the module but is never used in message_passing.
    for dependent, label, governor in triples:
        A = A.at[label_to_idx[label], dependent, governor].add(1.0)
        if reverse_case:
            A = A.at[label_to_idx[label + "_r"], governor, dependent].add(1.0)
    return A


def reference_forward(x, weights, biases, adjacency):
    """Pure-JAX reference mirroring the PyTorch message_passing + relu."""
    msgs = jnp.einsum("nd,lde->lne", x, weights) + biases[:, None, :]
    agg = jnp.einsum("lnm,lme->ne", adjacency, msgs)
    return jnp.maximum(agg, 0.0)


if __name__ == "__main__":
    # Small deterministic setup consistent with the module:
    #   in_dim  = number of tokens (rows of temp_tensor) = 8
    #   out_dim = hidden size = 32
    N_TOKENS = 8          # in_dim
    HIDDEN = 32           # out_dim
    dependency_list = ["nsubj", "obj", "amod"]
    reverse_case = True

    # Full label set, matching Dependency_GCNLayer.__init__ ordering.
    labels = ["self", "root"] + dependency_list + [d + "_r" for d in dependency_list]
    label_to_idx = {lab: i for i, lab in enumerate(labels)}
    L = len(labels)

    key = jax.random.PRNGKey(0)
    kx, kw, kb = jax.random.split(key, 3)

    # Token embeddings (N, D)
    x = jax.random.normal(kx, (N_TOKENS, HIDDEN), dtype=jnp.float32)

    # Per-label Linear(out_dim, out_dim) params, stored as (L, D_in, D_out)
    # (i.e. already transposed relative to PyTorch's (out, in) convention).
    weights = (jax.random.normal(kw, (L, HIDDEN, HIDDEN), dtype=jnp.float32)
               * (1.0 / jnp.sqrt(HIDDEN)))
    biases = jax.random.normal(kb, (L, HIDDEN), dtype=jnp.float32) * 0.1

    # Deterministic dependency triples: (dependent, label, governor)
    dependency_triples = [
        (1, "nsubj", 0),
        (2, "obj", 0),
        (3, "amod", 2),
        (5, "nsubj", 4),
        (6, "obj", 4),
        (7, "amod", 6),
        (3, "obj", 1),
    ]
    adjacency = build_adjacency(N_TOKENS, dependency_triples, label_to_idx,
                                reverse_case=reverse_case)

    # 'root' is never used in message_passing -> drop it from the kernel work.
    active = tuple(i for i, lab in enumerate(labels) if lab != "root")

    out = dep_gcn_forward(x, weights, biases, adjacency, active_labels=active)
    out = jax.block_until_ready(out)

    # Reference over ALL labels (root contributes zero since its adjacency is 0).
    ref = reference_forward(x, weights, biases, adjacency)
    assert out.shape == (N_TOKENS, HIDDEN)
    assert jnp.allclose(out, ref, atol=1e-4, rtol=1e-4), "mismatch vs reference"

    print("KERNEL_OK")
</pallas_src>

<mosaic_0001>
module attributes {stable_mosaic.version = 11 : i64} {
  func.func @kernel(%arg0: i32, %arg1: memref<8x32xf32, #tpu.memory_space<vmem>>, %arg2: memref<32x256xf32, #tpu.memory_space<vmem>>, %arg3: memref<8x8x8xf32, #tpu.memory_space<vmem>>, %arg4: memref<8x8xf32, #tpu.memory_space<vmem>>, %arg5: memref<8x32xf32, #tpu.memory_space<vmem>>, %arg6: memref<8x32xf32, #tpu.memory_space<vmem>>) attributes {dimension_semantics = [#tpu.dimension_semantics<arbitrary>], iteration_bounds = array<i64: 1>, scalar_prefetch = 0 : i64, scratch_operands = 0 : i64, tpu.core_type = #tpu.core_type<tc>, window_params = [{pipeline_mode = #tpu.pipeline_mode<synchronous>, transform_indices = @transform_0, window_bounds = array<i64: 8, 32>}, {pipeline_mode = #tpu.pipeline_mode<synchronous>, transform_indices = @transform_1, window_bounds = array<i64: 32, 256>}, {pipeline_mode = #tpu.pipeline_mode<synchronous>, transform_indices = @transform_2, window_bounds = array<i64: 8, 8, 8>}, {pipeline_mode = #tpu.pipeline_mode<synchronous>, transform_indices = @transform_3, window_bounds = array<i64: 8, 8>}, {pipeline_mode = #tpu.pipeline_mode<synchronous>, transform_indices = @transform_4, window_bounds = array<i64: 8, 32>}, {pipeline_mode = #tpu.pipeline_mode<synchronous>, transform_indices = @transform_5, window_bounds = array<i64: 8, 32>}]} {
    %c0 = arith.constant 0 : index
    %c0_0 = arith.constant 0 : index
    %0 = vector.load %arg1[%c0, %c0_0] : memref<8x32xf32, #tpu.memory_space<vmem>>, vector<8x32xf32>
    %c0_1 = arith.constant 0 : index
    %c0_2 = arith.constant 0 : index
    %1 = vector.load %arg4[%c0_1, %c0_2] : memref<8x8xf32, #tpu.memory_space<vmem>>, vector<8x8xf32>
    %c0_3 = arith.constant 0 : index
    %c0_4 = arith.constant 0 : index
    %2 = vector.load %arg5[%c0_3, %c0_4] : memref<8x32xf32, #tpu.memory_space<vmem>>, vector<8x32xf32>
    %cst = arith.constant dense<0.000000e+00> : vector<8x32xf32>
    %3 = tpu.matmul %1, %2, %cst {dimension_numbers = #tpu.dot_dimension_numbers<[1], [0], [0], [1], [0, 0, 1, 1], [], []>} : vector<8x8xf32>, vector<8x32xf32>, vector<8x32xf32> -> vector<8x32xf32>
    %c0_5 = arith.constant 0 : index
    %c0_6 = arith.constant 0 : index
    %4 = vector.load %arg2[%c0_5, %c0_6] : memref<32x256xf32, #tpu.memory_space<vmem>>, vector<32x256xf32>
    %cst_7 = arith.constant dense<0.000000e+00> : vector<8x256xf32>
    %5 = tpu.matmul %0, %4, %cst_7 {dimension_numbers = #tpu.dot_dimension_numbers<[1], [0], [0], [1], [0, 0, 1, 1], [], []>} : vector<8x32xf32>, vector<32x256xf32>, vector<8x256xf32> -> vector<8x256xf32>
    %c0_8 = arith.constant 0 : index
    %c0_9 = arith.constant 0 : index
    %c0_10 = arith.constant 0 : index
    %6 = vector.load %arg3[%c0_8, %c0_9, %c0_10] : memref<8x8x8xf32, #tpu.memory_space<vmem>>, vector<1x8x8xf32>
    %7 = vector.shape_cast %6 : vector<1x8x8xf32> to vector<8x8xf32>
    %8 = vector.extract_strided_slice %5 {offsets = [0, 0], sizes = [8, 32], strides = [1, 1]} : vector<8x256xf32> to vector<8x32xf32>
    %cst_11 = arith.constant dense<0.000000e+00> : vector<8x32xf32>
    %9 = tpu.matmul %7, %8, %cst_11 {dimension_numbers = #tpu.dot_dimension_numbers<[1], [0], [0], [1], [0, 0, 1, 1], [], []>} : vector<8x8xf32>, vector<8x32xf32>, vector<8x32xf32> -> vector<8x32xf32>
    %10 = arith.addf %3, %9 : vector<8x32xf32>
    %c1 = arith.constant 1 : index
    %c0_12 = arith.constant 0 : index
    %c0_13 = arith.constant 0 : index
    %11 = vector.load %arg3[%c1, %c0_12, %c0_13] : memref<8x8x8xf32, #tpu.memory_space<vmem>>, vector<1x8x8xf32>
    %12 = vector.shape_cast %11 : vector<1x8x8xf32> to vector<8x8xf32>
    %13 = vector.extract_strided_slice %5 {offsets = [0, 32], sizes = [8, 32], strides = [1, 1]} : vector<8x256xf32> to vector<8x32xf32>
    %cst_14 = arith.constant dense<0.000000e+00> : vector<8x32xf32>
    %14 = tpu.matmul %12, %13, %cst_14 {dimension_numbers = #tpu.dot_dimension_numbers<[1], [0], [0], [1], [0, 0, 1, 1], [], []>} : vector<8x8xf32>, vector<8x32xf32>, vector<8x32xf32> -> vector<8x32xf32>
    %15 = arith.addf %10, %14 : vector<8x32xf32>
    %c2 = arith.constant 2 : index
    %c0_15 = arith.constant 0 : index
    %c0_16 = arith.constant 0 : index
    %16 = vector.load %arg3[%c2, %c0_15, %c0_16] : memref<8x8x8xf32, #tpu.memory_space<vmem>>, vector<1x8x8xf32>
    %17 = vector.shape_cast %16 : vector<1x8x8xf32> to vector<8x8xf32>
    %18 = vector.extract_strided_slice %5 {offsets = [0, 64], sizes = [8, 32], strides = [1, 1]} : vector<8x256xf32> to vector<8x32xf32>
    %cst_17 = arith.constant dense<0.000000e+00> : vector<8x32xf32>
    %19 = tpu.matmul %17, %18, %cst_17 {dimension_numbers = #tpu.dot_dimension_numbers<[1], [0], [0], [1], [0, 0, 1, 1], [], []>} : vector<8x8xf32>, vector<8x32xf32>, vector<8x32xf32> -> vector<8x32xf32>
    %20 = arith.addf %15, %19 : vector<8x32xf32>
    %c3 = arith.constant 3 : index
    %c0_18 = arith.constant 0 : index
    %c0_19 = arith.constant 0 : index
    %21 = vector.load %arg3[%c3, %c0_18, %c0_19] : memref<8x8x8xf32, #tpu.memory_space<vmem>>, vector<1x8x8xf32>
    %22 = vector.shape_cast %21 : vector<1x8x8xf32> to vector<8x8xf32>
    %23 = vector.extract_strided_slice %5 {offsets = [0, 96], sizes = [8, 32], strides = [1, 1]} : vector<8x256xf32> to vector<8x32xf32>
    %cst_20 = arith.constant dense<0.000000e+00> : vector<8x32xf32>
    %24 = tpu.matmul %22, %23, %cst_20 {dimension_numbers = #tpu.dot_dimension_numbers<[1], [0], [0], [1], [0, 0, 1, 1], [], []>} : vector<8x8xf32>, vector<8x32xf32>, vector<8x32xf32> -> vector<8x32xf32>
    %25 = arith.addf %20, %24 : vector<8x32xf32>
    %c4 = arith.constant 4 : index
    %c0_21 = arith.constant 0 : index
    %c0_22 = arith.constant 0 : index
    %26 = vector.load %arg3[%c4, %c0_21, %c0_22] : memref<8x8x8xf32, #tpu.memory_space<vmem>>, vector<1x8x8xf32>
    %27 = vector.shape_cast %26 : vector<1x8x8xf32> to vector<8x8xf32>
    %28 = vector.extract_strided_slice %5 {offsets = [0, 128], sizes = [8, 32], strides = [1, 1]} : vector<8x256xf32> to vector<8x32xf32>
    %cst_23 = arith.constant dense<0.000000e+00> : vector<8x32xf32>
    %29 = tpu.matmul %27, %28, %cst_23 {dimension_numbers = #tpu.dot_dimension_numbers<[1], [0], [0], [1], [0, 0, 1, 1], [], []>} : vector<8x8xf32>, vector<8x32xf32>, vector<8x32xf32> -> vector<8x32xf32>
    %30 = arith.addf %25, %29 : vector<8x32xf32>
    %c5 = arith.constant 5 : index
    %c0_24 = arith.constant 0 : index
    %c0_25 = arith.constant 0 : index
    %31 = vector.load %arg3[%c5, %c0_24, %c0_25] : memref<8x8x8xf32, #tpu.memory_space<vmem>>, vector<1x8x8xf32>
    %32 = vector.shape_cast %31 : vector<1x8x8xf32> to vector<8x8xf32>
    %33 = vector.extract_strided_slice %5 {offsets = [0, 160], sizes = [8, 32], strides = [1, 1]} : vector<8x256xf32> to vector<8x32xf32>
    %cst_26 = arith.constant dense<0.000000e+00> : vector<8x32xf32>
    %34 = tpu.matmul %32, %33, %cst_26 {dimension_numbers = #tpu.dot_dimension_numbers<[1], [0], [0], [1], [0, 0, 1, 1], [], []>} : vector<8x8xf32>, vector<8x32xf32>, vector<8x32xf32> -> vector<8x32xf32>
    %35 = arith.addf %30, %34 : vector<8x32xf32>
    %c6 = arith.constant 6 : index
    %c0_27 = arith.constant 0 : index
    %c0_28 = arith.constant 0 : index
    %36 = vector.load %arg3[%c6, %c0_27, %c0_28] : memref<8x8x8xf32, #tpu.memory_space<vmem>>, vector<1x8x8xf32>
    %37 = vector.shape_cast %36 : vector<1x8x8xf32> to vector<8x8xf32>
    %38 = vector.extract_strided_slice %5 {offsets = [0, 192], sizes = [8, 32], strides = [1, 1]} : vector<8x256xf32> to vector<8x32xf32>
    %cst_29 = arith.constant dense<0.000000e+00> : vector<8x32xf32>
    %39 = tpu.matmul %37, %38, %cst_29 {dimension_numbers = #tpu.dot_dimension_numbers<[1], [0], [0], [1], [0, 0, 1, 1], [], []>} : vector<8x8xf32>, vector<8x32xf32>, vector<8x32xf32> -> vector<8x32xf32>
    %40 = arith.addf %35, %39 : vector<8x32xf32>
    %cst_30 = arith.constant 0.000000e+00 : f32
    %41 = vector.broadcast %cst_30 : f32 to vector<8x32xf32>
    %42 = arith.maximumf %40, %41 : vector<8x32xf32>
    %c0_31 = arith.constant 0 : index
    %c0_32 = arith.constant 0 : index
    %43 = vector.load %arg6[%c0_31, %c0_32] : memref<8x32xf32, #tpu.memory_space<vmem>>, vector<8x32xf32>
    tpu.vector_store %arg6[%c0_31, %c0_32], %42 {strides = array<i32>} : memref<8x32xf32, #tpu.memory_space<vmem>>, vector<8x32xf32>,
    return
  }
  func.func @transform_0(%arg0: i32) -> (i32, i32) {
    %c0_i32 = arith.constant 0 : i32
    %c0_i32_0 = arith.constant 0 : i32
    %c0_i32_1 = arith.constant 0 : i32
    return %c0_i32, %c0_i32_0 : i32, i32
  }
  func.func @transform_1(%arg0: i32) -> (i32, i32) {
    %c0_i32 = arith.constant 0 : i32
    %c0_i32_0 = arith.constant 0 : i32
    %c0_i32_1 = arith.constant 0 : i32
    return %c0_i32, %c0_i32_0 : i32, i32
  }
  func.func @transform_2(%arg0: i32) -> (i32, i32, i32) {
    %c0_i32 = arith.constant 0 : i32
    %c0_i32_0 = arith.constant 0 : i32
    %c0_i32_1 = arith.constant 0 : i32
    %c0_i32_2 = arith.constant 0 : i32
    return %c0_i32, %c0_i32_0, %c0_i32_1 : i32, i32, i32
  }
  func.func @transform_3(%arg0: i32) -> (i32, i32) {
    %c0_i32 = arith.constant 0 : i32
    %c0_i32_0 = arith.constant 0 : i32
    %c0_i32_1 = arith.constant 0 : i32
    return %c0_i32, %c0_i32_0 : i32, i32
  }
  func.func @transform_4(%arg0: i32) -> (i32, i32) {
    %c0_i32 = arith.constant 0 : i32
    %c0_i32_0 = arith.constant 0 : i32
    %c0_i32_1 = arith.constant 0 : i32
    return %c0_i32, %c0_i32_0 : i32, i32
  }
  func.func @transform_5(%arg0: i32) -> (i32, i32) {
    %c0_i32 = arith.constant 0 : i32
    %c0_i32_0 = arith.constant 0 : i32
    %c0_i32_1 = arith.constant 0 : i32
    return %c0_i32, %c0_i32_0 : i32, i32
  }
}

</mosaic_0001>

<llo_original>
// kernel: dep_gcn_forward.1
$region0: #{dep_gcn_forward.1}
  #allocation0 [shape = 'u32[]', space=smem, size = 0x4, offset = 0x4, fixed_abs, tag = 'smem constant byte address 0x4 - core index']
  #allocation1 [shape = 'u32[72,128]{1,0:T(1,128)}', space=vmem, size = 0x9000, scoped, tag = 'internal scratch']
  %s0 = inlined_call_operand.vmem [shape: f32[8,32], index: 0, kind: input, shape index: {}]
  %s1 = inlined_call_operand.vmem [shape: f32[32,256], index: 1, kind: input, shape index: {}]
  %s2 = inlined_call_operand.vmem [shape: f32[8,8,8], index: 2, kind: input, shape index: {}]
  %s3 = inlined_call_operand.vmem [shape: f32[8,8], index: 3, kind: input, shape index: {}]
  %s4 = inlined_call_operand.vmem [shape: f32[8,32], index: 4, kind: input, shape index: {}]
  %s5 = inlined_call_operand.hbm [shape: f32[8,32], index: 5, kind: output, shape index: {}]
  %s6 = sld [smem:[#allocation0]]
  $region30: #{dep_gcn_forward.1} parent=0
    _
  %s8 = ssub.s32 1, %s6
  %s9 = scalar_select 0, %s8, %s6
  $region1: #{dep_gcn_forward.1} parent=0
    #allocation2 [shape = 'u8[4096]{0}', space=vmem, size = 0x1000, scoped, tag = 'output window, operand 0, single buffered']
    #allocation3 [shape = 's32[1]{0}', space=sflag, size = 0x4, scoped, tag = 'scoped memory for dep_gcn_forward.1']
    %10 = vsyncpa [#allocation3], 0
    // Predicated region
    $region2: #{dep_gcn_forward.1} parent=1 // pred_check
      _
    $region3: #{dep_gcn_forward.1} parent=1 // pred_check_branch
      %12 = sbr.rel (0) target = $region5
    $region4: #{dep_gcn_forward.1} parent=1 // pred_region
      _
    $region5: #{dep_gcn_forward.1} parent=1 // pred_fallthru
      _
    // Predicated region
    $region6: #{dep_gcn_forward.1} parent=1 // pred_check
      _
    $region7: #{dep_gcn_forward.1} parent=1 // pred_check_branch
      %14 = sbr.rel (0) target = $region9
    $region8: #{dep_gcn_forward.1} parent=1 // pred_region
      _
    $region9: #{dep_gcn_forward.1} parent=1 // pred_fallthru
      _
    // Predicated region
    $region10: #{dep_gcn_forward.1} parent=1 // pred_check
      _
    $region11: #{dep_gcn_forward.1} parent=1 // pred_check_branch
      %16 = sbr.rel (0) target = $region13
    $region12: #{dep_gcn_forward.1} parent=1 // pred_region
      _
    $region13: #{dep_gcn_forward.1} parent=1 // pred_fallthru
      _
    // Predicated region
    $region14: #{dep_gcn_forward.1} parent=1 // pred_check
      _
    $region15: #{dep_gcn_forward.1} parent=1 // pred_check_branch
      %18 = sbr.rel (0) target = $region17
    $region16: #{dep_gcn_forward.1} parent=1 // pred_region
      _
    $region17: #{dep_gcn_forward.1} parent=1 // pred_fallthru
      _
    // Predicated region
    $region18: #{dep_gcn_forward.1} parent=1 // pred_check
      _
    $region19: #{dep_gcn_forward.1} parent=1 // pred_check_branch
      %20 = sbr.rel (0) target = $region21
    $region20: #{dep_gcn_forward.1} parent=1 // pred_region
      _
    $region21: #{dep_gcn_forward.1} parent=1 // pred_fallthru
      _
    %v21 = vld [vmem:[%s0] sm:$0xff]
    %v22 = vld [vmem:[%s3] sm:$0xff]
    %v23 = vld [vmem:[%s4] sm:$0xff]
    %v24 = vld [vmem:[%s1] sm:$0xff]
    %v25 = vld [vmem:[%s1 + $0x8] sm:$0xff]
    %v26 = vld [vmem:[%s1 + $0x10] sm:$0xff]
    %v27 = vld [vmem:[%s1 + $0x18] sm:$0xff]
    %v28 = vld [vmem:[%s1 + $0x20] sm:$0xff]
    %v29 = vld [vmem:[%s1 + $0x28] sm:$0xff]
    %v30 = vld [vmem:[%s1 + $0x30] sm:$0xff]
    %v31 = vld [vmem:[%s1 + $0x38] sm:$0xff]
    %vm32 = vcmask 261120
    %v34 = vsel %vm32, %v21, 0
    %36 = vmatpush.msra.mxu0 0.0
    %37 = vmatpush.msra.mxu0 0.0
    %38 = vmatpush.msra.mxu0 0.0
    %39 = vmatpush.msra.mxu0 0.0
    %40 = vmatpush.msra.mxu0 0.0
    %41 = vmatpush.msra.mxu0 0.0
    %42 = vmatpush.msra.mxu0 0.0
    %43 = vmatpush.msra.mxu0 0.0
    %44 = vmatpush.msra.mxu0 0.0
    %45 = vmatpush.msra.mxu0 0.0
    %46 = vmatpush.msra.mxu0 0.0
    %47 = vmatpush.msra.mxu0 0.0
    %48 = vmatpush.msra.mxu0 %v30
    %49 = vmatpush.msra.mxu0 %v28
    %50 = vmatpush.msra.mxu0 %v26
    %51 = vmatpush.msra.mxu0 %v24
    %52 = vmatmul.f32.gmra.mxu0 %v34
    %v53 = vpop.f32.mrf.mxu0
    %v54 = vadd.f32 0.0, %v53
    %55 = vdwg.mxu0
    %56 = vmatpush.msra.mxu0 0.0
    %57 = vmatpush.msra.mxu0 0.0
    %58 = vmatpush.msra.mxu0 0.0
    %59 = vmatpush.msra.mxu0 0.0
    %60 = vmatpush.msra.mxu0 0.0
    %61 = vmatpush.msra.mxu0 0.0
    %62 = vmatpush.msra.mxu0 0.0
    %63 = vmatpush.msra.mxu0 0.0
    %64 = vmatpush.msra.mxu0 0.0
    %65 = vmatpush.msra.mxu0 0.0
    %66 = vmatpush.msra.mxu0 0.0
    %67 = vmatpush.msra.mxu0 0.0
    %68 = vmatpush.msra.mxu0 %v31
    %69 = vmatpush.msra.mxu0 %v29
    %70 = vmatpush.msra.mxu0 %v27
    %71 = vmatpush.msra.mxu0 %v25
    %72 = vmatmul.f32.gmra.mxu0 %v34
    %v73 = vpop.f32.mrf.mxu0
    %v74 = vadd.f32 0.0, %v73
    %75 = vdwg.mxu0
    %v76 = vld [vmem:[%s2] sm:$0xff]
    %vm77 = vcmask 64512
    %v79 = vsel %vm77, %v76, 0
    %81 = vmatpush.msra.mxu0 0.0
    %82 = vmatpush.msra.mxu0 0.0
    %83 = vmatpush.msra.mxu0 0.0
    %84 = vmatpush.msra.mxu0 0.0
    %85 = vmatpush.msra.mxu0 0.0
    %86 = vmatpush.msra.mxu0 0.0
    %87 = vmatpush.msra.mxu0 0.0
    %88 = vmatpush.msra.mxu0 0.0
    %89 = vmatpush.msra.mxu0 0.0
    %90 = vmatpush.msra.mxu0 0.0
    %91 = vmatpush.msra.mxu0 0.0
    %92 = vmatpush.msra.mxu0 0.0
    %93 = vmatpush.msra.mxu0 0.0
    %94 = vmatpush.msra.mxu0 0.0
    %95 = vmatpush.msra.mxu0 0.0
    %96 = vmatpush.msra.mxu0 %v54
    %97 = vmatmul.f32.gmra.mxu0 %v79
    %v98 = vpop.f32.mrf.mxu0
    %v99 = vadd.f32 0.0, %v98
    %100 = vdwg.mxu0
    %v102 = vsel %vm77, %v22, 0
    %104 = vmatpush.msra.mxu0 0.0
    %105 = vmatpush.msra.mxu0 0.0
    %106 = vmatpush.msra.mxu0 0.0
    %107 = vmatpush.msra.mxu0 0.0
    %108 = vmatpush.msra.mxu0 0.0
    %109 = vmatpush.msra.mxu0 0.0
    %110 = vmatpush.msra.mxu0 0.0
    %111 = vmatpush.msra.mxu0 0.0
    %112 = vmatpush.msra.mxu0 0.0
    %113 = vmatpush.msra.mxu0 0.0
    %114 = vmatpush.msra.mxu0 0.0
    %115 = vmatpush.msra.mxu0 0.0
    %116 = vmatpush.msra.mxu0 0.0
    %117 = vmatpush.msra.mxu0 0.0
    %118 = vmatpush.msra.mxu0 0.0
    %119 = vmatpush.msra.mxu0 %v23
    %120 = vmatmul.f32.gmra.mxu0 %v102
    %v121 = vpop.f32.mrf.mxu0
    %v122 = vadd.f32 %v99, %v121
    %123 = vdwg.mxu0
    %s124 = scalar_lea.vmem %s2, 8
    %v125 = vld [vmem:[%s124] sm:$0xff]
    %127 = vrot.lane.b32.xlu0 %v54, 96
    %v128 = vpop.permute.xlu0 %127
    %v131 = vsel %vm77, %v125, 0
    %133 = vmatpush.msra.mxu0 0.0
    %134 = vmatpush.msra.mxu0 0.0
    %135 = vmatpush.msra.mxu0 0.0
    %136 = vmatpush.msra.mxu0 0.0
    %137 = vmatpush.msra.mxu0 0.0
    %138 = vmatpush.msra.mxu0 0.0
    %139 = vmatpush.msra.mxu0 0.0
    %140 = vmatpush.msra.mxu0 0.0
    %141 = vmatpush.msra.mxu0 0.0
    %142 = vmatpush.msra.mxu0 0.0
    %143 = vmatpush.msra.mxu0 0.0
    %144 = vmatpush.msra.mxu0 0.0
    %145 = vmatpush.msra.mxu0 0.0
    %146 = vmatpush.msra.mxu0 0.0
    %147 = vmatpush.msra.mxu0 0.0
    %148 = vmatpush.msra.mxu0 %v128
    %149 = vmatmul.f32.gmra.mxu0 %v131
    %v150 = vpop.f32.mrf.mxu0
    %v151 = vadd.f32 0.0, %v150
    %152 = vdwg.mxu0
    %v153 = vadd.f32 %v122, %v151
    %s154 = scalar_lea.vmem %s2, 16
    %v155 = vld [vmem:[%s154] sm:$0xff]
    %156 = vrot.lane.b32.xlu0 %v54, 64
    %v157 = vpop.permute.xlu0 %156
    %v160 = vsel %vm77, %v155, 0
    %162 = vmatpush.msra.mxu0 0.0
    %163 = vmatpush.msra.mxu0 0.0
    %164 = vmatpush.msra.mxu0 0.0
    %165 = vmatpush.msra.mxu0 0.0
    %166 = vmatpush.msra.mxu0 0.0
    %167 = vmatpush.msra.mxu0 0.0
    %168 = vmatpush.msra.mxu0 0.0
    %169 = vmatpush.msra.mxu0 0.0
    %170 = vmatpush.msra.mxu0 0.0
    %171 = vmatpush.msra.mxu0 0.0
    %172 = vmatpush.msra.mxu0 0.0
    %173 = vmatpush.msra.mxu0 0.0
    %174 = vmatpush.msra.mxu0 0.0
    %175 = vmatpush.msra.mxu0 0.0
    %176 = vmatpush.msra.mxu0 0.0
    %177 = vmatpush.msra.mxu0 %v157
    %178 = vmatmul.f32.gmra.mxu0 %v160
    %v179 = vpop.f32.mrf.mxu0
    %v180 = vadd.f32 0.0, %v179
    %181 = vdwg.mxu0
    %v182 = vadd.f32 %v153, %v180
    %s183 = scalar_lea.vmem %s2, 24
    %v184 = vld [vmem:[%s183] sm:$0xff]
    %185 = vrot.lane.b32.xlu0 %v54, 32
    %v186 = vpop.permute.xlu0 %185
    %v189 = vsel %vm77, %v184, 0
    %191 = vmatpush.msra.mxu0 0.0
    %192 = vmatpush.msra.mxu0 0.0
    %193 = vmatpush.msra.mxu0 0.0
    %194 = vmatpush.msra.mxu0 0.0
    %195 = vmatpush.msra.mxu0 0.0
    %196 = vmatpush.msra.mxu0 0.0
    %197 = vmatpush.msra.mxu0 0.0
    %198 = vmatpush.msra.mxu0 0.0
    %199 = vmatpush.msra.mxu0 0.0
    %200 = vmatpush.msra.mxu0 0.0
    %201 = vmatpush.msra.mxu0 0.0
    %202 = vmatpush.msra.mxu0 0.0
    %203 = vmatpush.msra.mxu0 0.0
    %204 = vmatpush.msra.mxu0 0.0
    %205 = vmatpush.msra.mxu0 0.0
    %206 = vmatpush.msra.mxu0 %v186
    %207 = vmatmul.f32.gmra.mxu0 %v189
    %v208 = vpop.f32.mrf.mxu0
    %v209 = vadd.f32 0.0, %v208
    %210 = vdwg.mxu0
    %v211 = vadd.f32 %v182, %v209
    %s212 = scalar_lea.vmem %s2, 32
    %v213 = vld [vmem:[%s212] sm:$0xff]
    %v215 = vsel %vm77, %v213, 0
    %217 = vmatpush.msra.mxu0 0.0
    %218 = vmatpush.msra.mxu0 0.0
    %219 = vmatpush.msra.mxu0 0.0
    %220 = vmatpush.msra.mxu0 0.0
    %221 = vmatpush.msra.mxu0 0.0
    %222 = vmatpush.msra.mxu0 0.0
    %223 = vmatpush.msra.mxu0 0.0
    %224 = vmatpush.msra.mxu0 0.0
    %225 = vmatpush.msra.mxu0 0.0
    %226 = vmatpush.msra.mxu0 0.0
    %227 = vmatpush.msra.mxu0 0.0
    %228 = vmatpush.msra.mxu0 0.0
    %229 = vmatpush.msra.mxu0 0.0
    %230 = vmatpush.msra.mxu0 0.0
    %231 = vmatpush.msra.mxu0 0.0
    %232 = vmatpush.msra.mxu0 %v74
    %233 = vmatmul.f32.gmra.mxu0 %v215
    %v234 = vpop.f32.mrf.mxu0
    %v235 = vadd.f32 0.0, %v234
    %236 = vdwg.mxu0
    %v237 = vadd.f32 %v211, %v235
    %s238 = scalar_lea.vmem %s2, 40
    %v239 = vld [vmem:[%s238] sm:$0xff]
    %241 = vrot.lane.b32.xlu0 %v74, 96
    %v242 = vpop.permute.xlu0 %241
    %v245 = vsel %vm77, %v239, 0
    %247 = vmatpush.msra.mxu0 0.0
    %248 = vmatpush.msra.mxu0 0.0
    %249 = vmatpush.msra.mxu0 0.0
    %250 = vmatpush.msra.mxu0 0.0
    %251 = vmatpush.msra.mxu0 0.0
    %252 = vmatpush.msra.mxu0 0.0
    %253 = vmatpush.msra.mxu0 0.0
    %254 = vmatpush.msra.mxu0 0.0
    %255 = vmatpush.msra.mxu0 0.0
    %256 = vmatpush.msra.mxu0 0.0
    %257 = vmatpush.msra.mxu0 0.0
    %258 = vmatpush.msra.mxu0 0.0
    %259 = vmatpush.msra.mxu0 0.0
    %260 = vmatpush.msra.mxu0 0.0
    %261 = vmatpush.msra.mxu0 0.0
    %262 = vmatpush.msra.mxu0 %v242
    %263 = vmatmul.f32.gmra.mxu0 %v245
    %v264 = vpop.f32.mrf.mxu0
    %v265 = vadd.f32 0.0, %v264
    %266 = vdwg.mxu0
    %v267 = vadd.f32 %v237, %v265
    %s268 = scalar_lea.vmem %s2, 48
    %v269 = vld [vmem:[%s268] sm:$0xff]
    %270 = vrot.lane.b32.xlu0 %v74, 64
    %v271 = vpop.permute.xlu0 %270
    %v274 = vsel %vm77, %v269, 0
    %276 = vmatpush.msra.mxu0 0.0
    %277 = vmatpush.msra.mxu0 0.0
    %278 = vmatpush.msra.mxu0 0.0
    %279 = vmatpush.msra.mxu0 0.0
    %280 = vmatpush.msra.mxu0 0.0
    %281 = vmatpush.msra.mxu0 0.0
    %282 = vmatpush.msra.mxu0 0.0
    %283 = vmatpush.msra.mxu0 0.0
    %284 = vmatpush.msra.mxu0 0.0
    %285 = vmatpush.msra.mxu0 0.0
    %286 = vmatpush.msra.mxu0 0.0
    %287 = vmatpush.msra.mxu0 0.0
    %288 = vmatpush.msra.mxu0 0.0
    %289 = vmatpush.msra.mxu0 0.0
    %290 = vmatpush.msra.mxu0 0.0
    %291 = vmatpush.msra.mxu0 %v271
    %292 = vmatmul.f32.gmra.mxu0 %v274
    %v293 = vpop.f32.mrf.mxu0
    %v294 = vadd.f32 0.0, %v293
    %295 = vdwg.mxu0
    %v296 = vadd.f32 %v267, %v294
    %v297 = vmax.f32 %v296, 0.0
    %298 = vst.msk [vmem:[#allocation2] sm:$0xff] %vm32, %v297
    // Predicated region
    $region22: #{dep_gcn_forward.1} parent=1 // pred_check
      _
    $region23: #{dep_gcn_forward.1} parent=1 // pred_check_branch
      %300 = sbr.rel (0) target = $region25
    $region24: #{dep_gcn_forward.1} parent=1 // pred_region
      %302 = vsyncadd [#allocation3], 0
      %s304 = sshll.u32 [#allocation2], 4
      %s305 = int_to_ptr.vmem [resolvable:$true] %s304
      %s306 = sshll.u32 %s5, 4
      %s307 = int_to_ptr.hbm [resolvable:$true] %s306
      %309 = dma.vmem_to_hbm [thread:$0]  %s305, 128, %s307, [#allocation3]
    $region25: #{dep_gcn_forward.1} parent=1 // pred_fallthru
      _
    // Predicated region
    $region26: #{dep_gcn_forward.1} parent=1 // pred_check
      _
    $region27: #{dep_gcn_forward.1} parent=1 // pred_check_branch
      %311 = sbr.rel (0) target = $region29
    $region28: #{dep_gcn_forward.1} parent=1 // pred_region
      %313 = dma.done [#allocation3], 128
    $region29: #{dep_gcn_forward.1} parent=1 // pred_fallthru
      _
    %314 = vsyncpa [#allocation3], 1

</llo_original>
